<compile_context>
chip_gen: v5e
topology: v5e:2x2
jax: 0.10.0
libtpu: 0.0.40
codegen_flags: <defaults>
</compile_context>

<pallas_src>
import functools

import jax
import jax.numpy as jnp
from jax.experimental import pallas as pl
from jax.experimental.pallas import tpu as pltpu


def upsample1d_kernel(x_ref, halo_ref, w_ref, b_ref, o_ref, *, seq_len, l_tile):
    # x_ref   : (1, C, TL)    current L-tile of x, NCL layout (L on lanes)
    # halo_ref: (1, 1, C, 2)  [:, 0] = x[:, tile_start-1], [:, 1] = x[:, tile_end]
    #                         (zeros at the global sequence edges)
    # w_ref   : (4, C, C)     w_ref[k] = weight[:, :, k].T   (C_out, C_in)
    # b_ref   : (C, 1)        bias, f32
    # o_ref   : (1, 2, C, TL) plane 0 = even outputs, plane 1 = odd outputs
    t = pl.program_id(1)
    x_cur = x_ref[0]                                    # (C, TL)
    halo = halo_ref[0, 0]                               # (C, 2)
    left = halo[:, 0:1]                                 # (C, 1)
    right = halo[:, 1:2]                                # (C, 1)

    lane = jax.lax.broadcasted_iota(jnp.int32, (1, l_tile), 1)
    gcol = lane + t * l_tile                            # global column index (ragged L)

    # x_prev[:, m] = x[:, m-1]; x_next[:, m] = x[:, m+1].  Tile-local lane rolls with
    # the boundary columns patched from the halos (zero padding at the sequence ends).
    x_prev = jnp.where(lane == 0, left, pltpu.roll(x_cur, shift=1, axis=1))
    x_next = jnp.where((lane == l_tile - 1) | (gcol == seq_len - 1), right,
                       pltpu.roll(x_cur, shift=l_tile - 1, axis=1))

    b = b_ref[...]                                      # (C, 1) f32
    even = (jnp.dot(w_ref[1], x_cur, preferred_element_type=jnp.float32)
            + jnp.dot(w_ref[3], x_prev, preferred_element_type=jnp.float32) + b)
    odd = (jnp.dot(w_ref[2], x_cur, preferred_element_type=jnp.float32)
           + jnp.dot(w_ref[0], x_next, preferred_element_type=jnp.float32) + b)
    o_ref[0, 0] = even.astype(o_ref.dtype)
    o_ref[0, 1] = odd.astype(o_ref.dtype)


def _pick_l_tile(C, L, in_itemsize, out_itemsize):
    """Pick an L-tile near the 512-2048 HBM-roofline sweet spot that fits VMEM.

    Per-step VMEM accounting (review fix): double-buffered x block, double-buffered
    (2, C, TL) output block, resident (worst case double-buffered) weights and the
    f32 in-kernel temporaries (x_cur/x_prev/x_next/even/odd).
    """
    budget = 24 * 1024 * 1024
    if L <= 256:
        return L
    fixed = 8 * C * C * in_itemsize                       # 4 weight mats x 2 buffers
    per_tl = C * (2 * in_itemsize + 4 * out_itemsize + 24)
    tl = (budget - fixed) // per_tl
    if tl >= L:
        return L
    tl = max(128, min(2048, (tl // 128) * 128))
    # TODO(synk): for very large C in f32 the resident weights alone exceed the budget
    # (cast weights to bf16 / single-buffer them, most relevant on v7x's 64 MiB VMEM).
    return tl


def upsample1d(x_ncl, weight, bias, *, compute_dtype=None, l_tile=None):
    """ConvTranspose1d(C, C, kernel=4, stride=2, padding=1) forward.

    x_ncl : (N, C, L)           PyTorch NCL layout
    weight: (C_in, C_out, 4)    PyTorch ConvTranspose1d weight layout
    bias  : (C_out,)
    compute_dtype: optional (e.g. jnp.bfloat16) for x / W inside the kernel
                   (halves HBM traffic; accumulation stays f32).
    l_tile: optional override of the L-tile (testing); must be a multiple of 128
            if smaller than L.
    returns (N, C, 2*L)
    """
    N, C, L = x_ncl.shape
    out_dtype = x_ncl.dtype
    cdt = jnp.dtype(compute_dtype) if compute_dtype is not None else jnp.dtype(out_dtype)

    x_c = x_ncl.astype(cdt)                                       # (N, C, L), no transpose

    if l_tile is None:
        tl = _pick_l_tile(C, L, cdt.itemsize, jnp.dtype(out_dtype).itemsize)
    else:
        tl = min(int(l_tile), L)
    if tl < L:
        assert tl % 128 == 0, "L-tile must be a multiple of 128 when it tiles L"
    T = (L + tl - 1) // tl                                        # ragged last tile OK

    # Merged halo side-input: halo[n, t, :, 0] = x[n, :, t*tl - 1]  (left neighbour),
    #                         halo[n, t, :, 1] = x[n, :, (t+1)*tl]  (right neighbour),
    # zeros at the global sequence edges.  Tiny: (N, T, C, 2) -> one small DMA / step.
    zcol = jnp.zeros((N, C, 1), cdt)
    tails = x_c[:, :, tl - 1::tl]                                 # (N, C, >= T-1)
    heads = x_c[:, :, ::tl]                                       # (N, C, T)
    left = jnp.concatenate([zcol, tails[:, :, :T - 1]], axis=2)   # (N, C, T)
    right = jnp.concatenate([heads[:, :, 1:T], zcol], axis=2)     # (N, C, T)
    halo = jnp.transpose(jnp.stack([left, right], axis=-1), (0, 2, 1, 3))  # (N, T, C, 2)

    # Pre-transposed taps: wT[k] = weight[:, :, k].T  ->  no zero-padded weight blocks.
    wT = jnp.transpose(weight, (2, 1, 0)).astype(cdt)             # (4, C_out, C_in)
    b2d = bias.astype(jnp.float32).reshape(C, 1)

    kernel = functools.partial(upsample1d_kernel, seq_len=L, l_tile=tl)
    out = pl.pallas_call(
        kernel,
        out_shape=jax.ShapeDtypeStruct((N, 2, C, L), out_dtype),
        grid_spec=pltpu.PrefetchScalarGridSpec(
            num_scalar_prefetch=0,
            grid=(N, T),
            in_specs=[
                pl.BlockSpec((1, C, tl), lambda n, t: (n, 0, t)),
                pl.BlockSpec((1, 1, C, 2), lambda n, t: (n, t, 0, 0)),
                pl.BlockSpec((4, C, C), lambda n, t: (0, 0, 0)),
                pl.BlockSpec((C, 1), lambda n, t: (0, 0)),
            ],
            out_specs=pl.BlockSpec((1, 2, C, tl), lambda n, t: (n, 0, 0, t)),
        ),
        compiler_params=pltpu.CompilerParams(
            # both axes independent; N*T >= 2 keeps both v7x TensorCores busy
            dimension_semantics=("parallel", "parallel"),
            vmem_limit_bytes=48 * 1024 * 1024),
    )(x_c, halo, wT, b2d)

    # Interleave even/odd planes back to PyTorch NCL: (N,2,C,L) -> (N,C,L,2) -> (N,C,2L).
    # This is the single remaining full-array layout pass (v1 had two).
    return jnp.transpose(out, (0, 2, 3, 1)).reshape(N, C, 2 * L)


def ref_conv_transpose1d(x, w, b):
    """Vectorized pure-JAX reference for ConvTranspose1d(C, C, 4, 2, 1)."""
    N, C, L = x.shape
    hi = jax.lax.Precision.HIGHEST
    xp = jnp.concatenate([jnp.zeros((N, C, 1), x.dtype), x[:, :, :-1]], axis=2)
    xn = jnp.concatenate([x[:, :, 1:], jnp.zeros((N, C, 1), x.dtype)], axis=2)
    even = (jnp.einsum('ncl,cd->ndl', x, w[:, :, 1], precision=hi)
            + jnp.einsum('ncl,cd->ndl', xp, w[:, :, 3], precision=hi))
    odd = (jnp.einsum('ncl,cd->ndl', x, w[:, :, 2], precision=hi)
           + jnp.einsum('ncl,cd->ndl', xn, w[:, :, 0], precision=hi))
    y = jnp.stack([even, odd], axis=-1).reshape(N, C, 2 * L)
    return y + b[None, :, None]


def ref_conv_transpose1d_loop(x, w, b):
    """Definitional (scatter-form) reference; small shapes only."""
    N, C, L = x.shape
    Lo = 2 * L
    y = jnp.zeros((N, C, Lo), jnp.float32)
    for k in range(4):
        for l in range(L):
            t = 2 * l - 1 + k               # stride*l - padding + k
            if 0 <= t < Lo:
                y = y.at[:, :, t].add(
                    jnp.einsum('nc,cd->nd', x[:, :, l], w[:, :, k],
                               precision=jax.lax.Precision.HIGHEST))
    return y + b[None, :, None]


if __name__ == "__main__":
    key = jax.random.PRNGKey(0)

    def _case(idx, N, C, L, l_tile=None, atol=1e-4, rtol=1e-4):
        kx, kw, kb = jax.random.split(jax.random.fold_in(key, idx), 3)
        x = jax.random.normal(kx, (N, C, L), dtype=jnp.float32)
        w = jax.random.normal(kw, (C, C, 4), dtype=jnp.float32) * 0.1
        b = jax.random.normal(kb, (C,), dtype=jnp.float32) * 0.1
        out = jax.block_until_ready(upsample1d(x, w, b, l_tile=l_tile))
        ref = ref_conv_transpose1d(x, w, b)
        assert out.shape == (N, C, 2 * L), out.shape
        err = jnp.max(jnp.abs(out - ref))
        assert jnp.allclose(out, ref, rtol=rtol, atol=atol), f"case {idx}: max err {err}"
        return x, w, b, out

    # 1) small, spec-like shape (dim=4); cross-check against the definitional loop ref.
    x, w, b, out = _case(0, N=2, C=4, L=16)
    ref_loop = ref_conv_transpose1d_loop(x, w, b)
    assert jnp.allclose(out, ref_loop, rtol=1e-4, atol=1e-4), \
        f"loop-ref mismatch: {jnp.max(jnp.abs(out - ref_loop))}"

    # 2) lane-aligned channels + multiple L-tiles (exercises the cross-tile halo path).
    _case(1, N=2, C=128, L=512, l_tile=128, atol=1e-3, rtol=1e-3)

    # 3) ragged L (last tile partial; masked in-kernel, no wrapper padding pass).
    _case(2, N=2, C=8, L=200, l_tile=128)

    print("KERNEL_OK")
</pallas_src>

<mosaic_0001>
module attributes {stable_mosaic.version = 11 : i64} {
  func.func @upsample1d_kernel(%arg0: i32, %arg1: i32, %arg2: memref<1x4x16xf32, #tpu.memory_space<vmem>>, %arg3: memref<1x1x4x2xf32, #tpu.memory_space<vmem>>, %arg4: memref<4x4x4xf32, #tpu.memory_space<vmem>>, %arg5: memref<4x1xf32, #tpu.memory_space<vmem>>, %arg6: memref<1x2x4x16xf32, #tpu.memory_space<vmem>>) attributes {dimension_semantics = [#tpu.dimension_semantics<parallel>, #tpu.dimension_semantics<parallel>], iteration_bounds = array<i64: 2, 1>, scalar_prefetch = 0 : i64, scratch_operands = 0 : i64, tpu.core_type = #tpu.core_type<tc>, window_params = [{transform_indices = @transform_0, window_bounds = array<i64: 1, 4, 16>}, {transform_indices = @transform_1, window_bounds = array<i64: 1, 1, 4, 2>}, {pipeline_mode = #tpu.pipeline_mode<synchronous>, transform_indices = @transform_2, window_bounds = array<i64: 4, 4, 4>}, {pipeline_mode = #tpu.pipeline_mode<synchronous>, transform_indices = @transform_3, window_bounds = array<i64: 4, 1>}, {transform_indices = @transform_4, window_bounds = array<i64: 1, 2, 4, 16>}]} {
    %c0 = arith.constant 0 : index
    %c0_0 = arith.constant 0 : index
    %c0_1 = arith.constant 0 : index
    %0 = vector.load %arg2[%c0, %c0_0, %c0_1] : memref<1x4x16xf32, #tpu.memory_space<vmem>>, vector<1x4x16xf32>
    %1 = vector.shape_cast %0 : vector<1x4x16xf32> to vector<4x16xf32>
    %c0_2 = arith.constant 0 : index
    %c0_3 = arith.constant 0 : index
    %c0_4 = arith.constant 0 : index
    %c0_5 = arith.constant 0 : index
    %2 = vector.load %arg3[%c0_2, %c0_3, %c0_4, %c0_5] : memref<1x1x4x2xf32, #tpu.memory_space<vmem>>, vector<1x1x4x2xf32>
    %3 = vector.shape_cast %2 : vector<1x1x4x2xf32> to vector<4x2xf32>
    %4 = vector.extract_strided_slice %3 {offsets = [0, 0], sizes = [4, 1], strides = [1, 1]} : vector<4x2xf32> to vector<4x1xf32>
    %5 = vector.extract_strided_slice %3 {offsets = [0, 1], sizes = [4, 1], strides = [1, 1]} : vector<4x2xf32> to vector<4x1xf32>
    %6 = tpu.iota {dimensions = array<i32: 1>} : vector<1x16xi32>
    %c16_i32 = arith.constant 16 : i32
    %7 = arith.muli %arg1, %c16_i32 : i32
    %8 = vector.broadcast %7 : i32 to vector<1x16xi32>
    %9 = arith.addi %6, %8 : vector<1x16xi32>
    %c0_i32 = arith.constant 0 : i32
    %10 = vector.broadcast %c0_i32 : i32 to vector<1x16xi32>
    %11 = arith.cmpi eq, %6, %10 : vector<1x16xi32>
    %c1_i32 = arith.constant 1 : i32
    %12 = tpu.dynamic_rotate %1 by %c1_i32 dim 1 : vector<4x16xf32>, i32 -> vector<4x16xf32>
    %13 = vector.shape_cast %11 : vector<1x16xi1> to vector<1x16xi1>
    %14 = vector.broadcast %13 : vector<1x16xi1> to vector<4x16xi1>
    %15 = vector.shape_cast %4 : vector<4x1xf32> to vector<4x1xf32>
    %16 = vector.broadcast %15 : vector<4x1xf32> to vector<4x16xf32>
    %17 = arith.select %14, %16, %12 : vector<4x16xi1>, vector<4x16xf32>
    %c15_i32 = arith.constant 15 : i32
    %18 = vector.broadcast %c15_i32 : i32 to vector<1x16xi32>
    %19 = arith.cmpi eq, %6, %18 : vector<1x16xi32>
    %c15_i32_6 = arith.constant 15 : i32
    %20 = vector.broadcast %c15_i32_6 : i32 to vector<1x16xi32>
    %21 = arith.cmpi eq, %9, %20 : vector<1x16xi32>
    %22 = arith.ori %19, %21 : vector<1x16xi1>
    %c15_i32_7 = arith.constant 15 : i32
    %23 = tpu.dynamic_rotate %1 by %c15_i32_7 dim 1 : vector<4x16xf32>, i32 -> vector<4x16xf32>
    %24 = vector.shape_cast %22 : vector<1x16xi1> to vector<1x16xi1>
    %25 = vector.broadcast %24 : vector<1x16xi1> to vector<4x16xi1>
    %26 = vector.shape_cast %5 : vector<4x1xf32> to vector<4x1xf32>
    %27 = vector.broadcast %26 : vector<4x1xf32> to vector<4x16xf32>
    %28 = arith.select %25, %27, %23 : vector<4x16xi1>, vector<4x16xf32>
    %c0_8 = arith.constant 0 : index
    %c0_9 = arith.constant 0 : index
    %29 = vector.load %arg5[%c0_8, %c0_9] : memref<4x1xf32, #tpu.memory_space<vmem>>, vector<4x1xf32>
    %c1 = arith.constant 1 : index
    %c0_10 = arith.constant 0 : index
    %c0_11 = arith.constant 0 : index
    %30 = vector.load %arg4[%c1, %c0_10, %c0_11] : memref<4x4x4xf32, #tpu.memory_space<vmem>>, vector<1x4x4xf32>
    %31 = vector.shape_cast %30 : vector<1x4x4xf32> to vector<4x4xf32>
    %cst = arith.constant dense<0.000000e+00> : vector<4x16xf32>
    %32 = tpu.matmul %31, %1, %cst {dimension_numbers = #tpu.dot_dimension_numbers<[1], [0], [0], [1], [0, 0, 1, 1], [], []>} : vector<4x4xf32>, vector<4x16xf32>, vector<4x16xf32> -> vector<4x16xf32>
    %c3 = arith.constant 3 : index
    %c0_12 = arith.constant 0 : index
    %c0_13 = arith.constant 0 : index
    %33 = vector.load %arg4[%c3, %c0_12, %c0_13] : memref<4x4x4xf32, #tpu.memory_space<vmem>>, vector<1x4x4xf32>
    %34 = vector.shape_cast %33 : vector<1x4x4xf32> to vector<4x4xf32>
    %cst_14 = arith.constant dense<0.000000e+00> : vector<4x16xf32>
    %35 = tpu.matmul %34, %17, %cst_14 {dimension_numbers = #tpu.dot_dimension_numbers<[1], [0], [0], [1], [0, 0, 1, 1], [], []>} : vector<4x4xf32>, vector<4x16xf32>, vector<4x16xf32> -> vector<4x16xf32>
    %36 = arith.addf %32, %35 : vector<4x16xf32>
    %37 = vector.broadcast %29 : vector<4x1xf32> to vector<4x16xf32>
    %38 = arith.addf %36, %37 : vector<4x16xf32>
    %c2 = arith.constant 2 : index
    %c0_15 = arith.constant 0 : index
    %c0_16 = arith.constant 0 : index
    %39 = vector.load %arg4[%c2, %c0_15, %c0_16] : memref<4x4x4xf32, #tpu.memory_space<vmem>>, vector<1x4x4xf32>
    %40 = vector.shape_cast %39 : vector<1x4x4xf32> to vector<4x4xf32>
    %cst_17 = arith.constant dense<0.000000e+00> : vector<4x16xf32>
    %41 = tpu.matmul %40, %1, %cst_17 {dimension_numbers = #tpu.dot_dimension_numbers<[1], [0], [0], [1], [0, 0, 1, 1], [], []>} : vector<4x4xf32>, vector<4x16xf32>, vector<4x16xf32> -> vector<4x16xf32>
    %c0_18 = arith.constant 0 : index
    %c0_19 = arith.constant 0 : index
    %c0_20 = arith.constant 0 : index
    %42 = vector.load %arg4[%c0_18, %c0_19, %c0_20] : memref<4x4x4xf32, #tpu.memory_space<vmem>>, vector<1x4x4xf32>
    %43 = vector.shape_cast %42 : vector<1x4x4xf32> to vector<4x4xf32>
    %cst_21 = arith.constant dense<0.000000e+00> : vector<4x16xf32>
    %44 = tpu.matmul %43, %28, %cst_21 {dimension_numbers = #tpu.dot_dimension_numbers<[1], [0], [0], [1], [0, 0, 1, 1], [], []>} : vector<4x4xf32>, vector<4x16xf32>, vector<4x16xf32> -> vector<4x16xf32>
    %45 = arith.addf %41, %44 : vector<4x16xf32>
    %46 = vector.broadcast %29 : vector<4x1xf32> to vector<4x16xf32>
    %47 = arith.addf %45, %46 : vector<4x16xf32>
    %c0_22 = arith.constant 0 : index
    %c0_23 = arith.constant 0 : index
    %c0_24 = arith.constant 0 : index
    %c0_25 = arith.constant 0 : index
    %48 = vector.load %arg6[%c0_22, %c0_23, %c0_24, %c0_25] : memref<1x2x4x16xf32, #tpu.memory_space<vmem>>, vector<1x1x4x16xf32>
    %49 = vector.shape_cast %48 : vector<1x1x4x16xf32> to vector<4x16xf32>
    %50 = vector.shape_cast %38 : vector<4x16xf32> to vector<1x1x4x16xf32>
    tpu.vector_store %arg6[%c0_22, %c0_23, %c0_24, %c0_25], %50 {strides = array<i32>} : memref<1x2x4x16xf32, #tpu.memory_space<vmem>>, vector<1x1x4x16xf32>,
    %c0_26 = arith.constant 0 : index
    %c1_27 = arith.constant 1 : index
    %c0_28 = arith.constant 0 : index
    %c0_29 = arith.constant 0 : index
    %51 = vector.load %arg6[%c0_26, %c1_27, %c0_28, %c0_29] : memref<1x2x4x16xf32, #tpu.memory_space<vmem>>, vector<1x1x4x16xf32>
    %52 = vector.shape_cast %51 : vector<1x1x4x16xf32> to vector<4x16xf32>
    %53 = vector.shape_cast %47 : vector<4x16xf32> to vector<1x1x4x16xf32>
    tpu.vector_store %arg6[%c0_26, %c1_27, %c0_28, %c0_29], %53 {strides = array<i32>} : memref<1x2x4x16xf32, #tpu.memory_space<vmem>>, vector<1x1x4x16xf32>,
    return
  }
  func.func @transform_0(%arg0: i32, %arg1: i32) -> (i32, i32, i32) {
    %c0_i32 = arith.constant 0 : i32
    %c0_i32_0 = arith.constant 0 : i32
    return %arg0, %c0_i32, %arg1 : i32, i32, i32
  }
  func.func @transform_1(%arg0: i32, %arg1: i32) -> (i32, i32, i32, i32) {
    %c0_i32 = arith.constant 0 : i32
    %c0_i32_0 = arith.constant 0 : i32
    %c0_i32_1 = arith.constant 0 : i32
    return %arg0, %arg1, %c0_i32, %c0_i32_0 : i32, i32, i32, i32
  }
  func.func @transform_2(%arg0: i32, %arg1: i32) -> (i32, i32, i32) {
    %c0_i32 = arith.constant 0 : i32
    %c0_i32_0 = arith.constant 0 : i32
    %c0_i32_1 = arith.constant 0 : i32
    %c0_i32_2 = arith.constant 0 : i32
    return %c0_i32, %c0_i32_0, %c0_i32_1 : i32, i32, i32
  }
  func.func @transform_3(%arg0: i32, %arg1: i32) -> (i32, i32) {
    %c0_i32 = arith.constant 0 : i32
    %c0_i32_0 = arith.constant 0 : i32
    %c0_i32_1 = arith.constant 0 : i32
    return %c0_i32, %c0_i32_0 : i32, i32
  }
  func.func @transform_4(%arg0: i32, %arg1: i32) -> (i32, i32, i32, i32) {
    %c0_i32 = arith.constant 0 : i32
    %c0_i32_0 = arith.constant 0 : i32
    %c0_i32_1 = arith.constant 0 : i32
    return %arg0, %c0_i32, %c0_i32_0, %arg1 : i32, i32, i32, i32
  }
}

</mosaic_0001>

<llo_original>
// kernel: tpu_custom_call.1
$region0: #{tpu_custom_call.1}
  #allocation0 [shape = 'u32[]', space=smem, size = 0x4, offset = 0x4, fixed_abs, tag = 'smem constant byte address 0x4 - core index']
  #allocation1 [shape = 'u32[72,128]{1,0:T(1,128)}', space=vmem, size = 0x9000, scoped, tag = 'internal scratch']
  %s0 = inlined_call_operand.vmem [shape: f32[2,4,16], index: 0, kind: input, shape index: {}]
  %s1 = inlined_call_operand.vmem [shape: f32[2,1,4,2], index: 1, kind: input, shape index: {}]
  %s2 = inlined_call_operand.hbm [shape: f32[4,4,4], index: 2, kind: input, shape index: {}]
  %s3 = inlined_call_operand.vmem [shape: f32[4,1], index: 3, kind: input, shape index: {}]
  %s4 = inlined_call_operand.hbm [shape: f32[2,2,4,16], index: 4, kind: output, shape index: {}]
  %s5 = sld [smem:[#allocation0]]
  $region53: #{tpu_custom_call.1} parent=0
    _
  %s7 = ssub.s32 1, %s5
  %s8 = scalar_select 0, %s7, %s5
  $region1: #{tpu_custom_call.1} parent=0
    #allocation2 [shape = 'u8[8192]{0}', space=vmem, size = 0x2000, scoped, tag = 'input window, operand 2, single buffered']
    #allocation3 [shape = 's32[2]{0}', space=sflag, size = 0x8, scoped, tag = 'scoped memory for tpu_custom_call.1']
    #allocation4 [shape = 's32[2]{0}', space=sflag, size = 0x8, scoped, tag = 'scoped memory for tpu_custom_call.1']
    #allocation5 [shape = 'u8[8192]{0}', space=vmem, size = 0x2000, scoped, tag = 'output window, operand 0']
    %9 = vsyncpa [#allocation3], 0
    %10 = vsyncpa [#allocation4], 0
    %s11 = scalar_lea.sflag [#allocation4], 1
    %12 = vsyncpa %s11, 0
    loop: start=0, step=1, limit=4
    $region2: #{tpu_custom_call.1} parent=1 // loop_pre_header
      _
    $region3: #{tpu_custom_call.1} parent=1 // loop_header
      %s14 = sphi 0, %s18
      %p15 = scmp.ge.s32.totalorder %s14, 4
      %s21 = sphi 0, %s33
      %s22 = sphi 0, %s29
      %s23 = sphi 0, %s21
      %s24 = sphi 0, %s22
      %s25 = sphi 0, %s23
      %s26 = sphi 0, %s24
      %s38 = sphi 0, %s40
      %s41 = sphi 0, %s38
      %s42 = sphi 0, %s41
      %s58 = sphi 0, %s42
      %s66 = sphi 0, %s68
      %s69 = sphi 0, %s66
      %s70 = sphi 0, %s69
      %s86 = sphi 0, %s70
      %s90 = sphi 0, %s90
      %s92 = sphi 0, %s90
      %s93 = sphi 0, %s92
      %s107 = sphi 0, %s93
      %s111 = sphi 0, %s111
      %s113 = sphi 0, %s111
      %s114 = sphi 0, %s113
      %s128 = sphi 0, %s114
      %s136 = sphi 0, %s138
      %s139 = sphi 0, %s136
      %s140 = sphi 0, %s139
      %s156 = sphi 0, %s140
    $region4: #{tpu_custom_call.1} parent=1 // loop_header_branch
      %17 = sbr.rel (%p15) target = $region8
    $region5: #{tpu_custom_call.1} parent=1 // loop_body
      %s19 = ssub.s32 %s14, 1
      %s20 = ssub.s32 %s14, 2
      %s27 = sadd.s32 1, %s22
      %p28 = scmp.ge.s32.totalorder %s27, 1
      %s29 = scalar_select %p28, 0, %s27
      %s30 = sadd.s32 1, %s21
      %s31 = scalar_select %p28, %s30, %s21
      %p32 = scmp.ge.s32.totalorder %s31, 2
      %s33 = scalar_select %p32, 0, %s31
      %s34 = ssub.s32 %s21, %s33
      %s35 = ssub.s32 %s22, %s29
      %s36 = sor.u32 %s34, %s35
      %p37 = scmp.eq.s32.totalorder %s36, 0
      %s39 = sadd.s32 %s38, 1
      %s40 = scalar_select %p37, %s38, %s39
      %p43 = pneg %p37
      %p44 = scmp.eq.s32.totalorder %s14, 1
      %p45 = por %p43, %p44
      %p46 = scmp.ne.s32.totalorder %s38, %s41
      %p47 = scmp.eq.s32.totalorder %s14, 0
      %p48 = por %p46, %p47
      %p49 = scmp.ne.s32.totalorder %s38, %s41
      %p50 = scmp.eq.s32.totalorder %s19, 1
      %p51 = por %p49, %p50
      %p52 = scmp.ne.s32.totalorder %s41, %s42
      %p53 = scmp.eq.s32.totalorder %s19, 0
      %p54 = por %p52, %p53
      %p55 = scmp.ne.s32.totalorder %s41, %s42
      %p56 = scmp.eq.s32.totalorder %s20, 1
      %p57 = por %p55, %p56
      %p59 = scmp.ne.s32.totalorder %s42, %s58
      %p60 = scmp.eq.s32.totalorder %s20, 0
      %p61 = por %p59, %p60
      %s62 = ssub.s32 %s21, %s33
      %s63 = ssub.s32 %s22, %s29
      %s64 = sor.u32 %s62, %s63
      %p65 = scmp.eq.s32.totalorder %s64, 0
      %s67 = sadd.s32 %s66, 1
      %s68 = scalar_select %p65, %s66, %s67
      %p71 = pneg %p65
      %p72 = scmp.eq.s32.totalorder %s14, 1
      %p73 = por %p71, %p72
      %p74 = scmp.ne.s32.totalorder %s66, %s69
      %p75 = scmp.eq.s32.totalorder %s14, 0
      %p76 = por %p74, %p75
      %p77 = scmp.ne.s32.totalorder %s66, %s69
      %p78 = scmp.eq.s32.totalorder %s19, 1
      %p79 = por %p77, %p78
      %p80 = scmp.ne.s32.totalorder %s69, %s70
      %p81 = scmp.eq.s32.totalorder %s19, 0
      %p82 = por %p80, %p81
      %p83 = scmp.ne.s32.totalorder %s69, %s70
      %p84 = scmp.eq.s32.totalorder %s20, 1
      %p85 = por %p83, %p84
      %p87 = scmp.ne.s32.totalorder %s70, %s86
      %p88 = scmp.eq.s32.totalorder %s20, 0
      %p89 = por %p87, %p88
      %s91 = sadd.s32 %s90, 1
      %p94 = scmp.eq.s32.totalorder %s14, 1
      %p95 = scmp.ne.s32.totalorder %s90, %s92
      %p96 = scmp.eq.s32.totalorder %s14, 0
      %p97 = por %p95, %p96
      %p98 = scmp.ne.s32.totalorder %s90, %s92
      %p99 = scmp.eq.s32.totalorder %s19, 1
      %p100 = por %p98, %p99
      %p101 = scmp.ne.s32.totalorder %s92, %s93
      %p102 = scmp.eq.s32.totalorder %s19, 0
      %p103 = por %p101, %p102
      %p104 = scmp.ne.s32.totalorder %s92, %s93
      %p105 = scmp.eq.s32.totalorder %s20, 1
      %p106 = por %p104, %p105
      %p108 = scmp.ne.s32.totalorder %s93, %s107
      %p109 = scmp.eq.s32.totalorder %s20, 0
      %p110 = por %p108, %p109
      %s112 = sadd.s32 %s111, 1
      %p115 = scmp.eq.s32.totalorder %s14, 1
      %p116 = scmp.ne.s32.totalorder %s111, %s113
      %p117 = scmp.eq.s32.totalorder %s14, 0
      %p118 = por %p116, %p117
      %p119 = scmp.ne.s32.totalorder %s111, %s113
      %p120 = scmp.eq.s32.totalorder %s19, 1
      %p121 = por %p119, %p120
      %p122 = scmp.ne.s32.totalorder %s113, %s114
      %p123 = scmp.eq.s32.totalorder %s19, 0
      %p124 = por %p122, %p123
      %p125 = scmp.ne.s32.totalorder %s113, %s114
      %p126 = scmp.eq.s32.totalorder %s20, 1
      %p127 = por %p125, %p126
      %p129 = scmp.ne.s32.totalorder %s114, %s128
      %p130 = scmp.eq.s32.totalorder %s20, 0
      %p131 = por %p129, %p130
      %s132 = ssub.s32 %s21, %s33
      %s133 = ssub.s32 %s22, %s29
      %s134 = sor.u32 %s132, %s133
      %p135 = scmp.eq.s32.totalorder %s134, 0
      %s137 = sadd.s32 %s136, 1
      %s138 = scalar_select %p135, %s136, %s137
      %p141 = pneg %p135
      %p142 = scmp.eq.s32.totalorder %s14, 1
      %p143 = por %p141, %p142
      %p144 = scmp.ne.s32.totalorder %s136, %s139
      %p145 = scmp.eq.s32.totalorder %s14, 0
      %p146 = por %p144, %p145
      %p147 = scmp.ne.s32.totalorder %s136, %s139
      %p148 = scmp.eq.s32.totalorder %s19, 1
      %p149 = por %p147, %p148
      %p150 = scmp.ne.s32.totalorder %s139, %s140
      %p151 = scmp.eq.s32.totalorder %s19, 0
      %p152 = por %p150, %p151
      %p153 = scmp.ne.s32.totalorder %s139, %s140
      %p154 = scmp.eq.s32.totalorder %s20, 1
      %p155 = por %p153, %p154
      %p157 = scmp.ne.s32.totalorder %s140, %s156
      %p158 = scmp.eq.s32.totalorder %s20, 0
      %p159 = por %p157, %p158
      %p160 = scmp.le.s32.totalorder 1, %s14
      %p161 = scmp.lt.s32.totalorder %s14, 3
      %p162 = pnand %p160, %p161
      %p163 = pneg %p162
      // Predicated region
      $region9: #{tpu_custom_call.1} parent=5 // pred_check
        _
      $region10: #{tpu_custom_call.1} parent=5 // pred_check_branch
        %165 = sbr.rel (%p162) target = $region12
      $region11: #{tpu_custom_call.1} parent=5 // pred_region
        %s166 = ssub.s32 %s14, 1
        // Predicated region
        $region13: #{tpu_custom_call.1} parent=11 // pred_check
          %p167 = pneg %p103
        $region14: #{tpu_custom_call.1} parent=11 // pred_check_branch
          %169 = sbr.rel (%p167) target = $region16
        $region15: #{tpu_custom_call.1} parent=11 // pred_region
          %171 = vsyncadd [#allocation3], 0
          %s172 = sshll.u32 %s2, 4
          %s173 = int_to_ptr.hbm [resolvable:$true] %s172
          %s174 = sshll.u32 [#allocation2], 4
          %s175 = int_to_ptr.vmem [resolvable:$true] %s174
          %180 = dma.hbm_to_vmem [thread:$0]  %s173, 256, %s175, [#allocation3], 64, 64, 4
        $region16: #{tpu_custom_call.1} parent=11 // pred_fallthru
          _
        // Predicated region
        $region17: #{tpu_custom_call.1} parent=11 // pred_check
          %p181 = pneg %p124
        $region18: #{tpu_custom_call.1} parent=11 // pred_check_branch
          %183 = sbr.rel (%p181) target = $region20
        $region19: #{tpu_custom_call.1} parent=11 // pred_region
          _
        $region20: #{tpu_custom_call.1} parent=11 // pred_fallthru
          _
      $region12: #{tpu_custom_call.1} parent=5 // pred_fallthru
        _
      %p184 = scmp.lt.s32.totalorder %s14, 2
      // Predicated region
      $region21: #{tpu_custom_call.1} parent=5 // pred_check
        %p185 = pneg %p184
      $region22: #{tpu_custom_call.1} parent=5 // pred_check_branch
        %187 = sbr.rel (%p185) target = $region24
      $region23: #{tpu_custom_call.1} parent=5 // pred_region
        // Predicated region
        $region25: #{tpu_custom_call.1} parent=23 // pred_check
          %p188 = pneg %p48
        $region26: #{tpu_custom_call.1} parent=23 // pred_check_branch
          %190 = sbr.rel (%p188) target = $region28
        $region27: #{tpu_custom_call.1} parent=23 // pred_region
          %p191 = scmp.lt.s32.totalorder %s21, 1
          %s192 = scalar_select %p191, %s21, 1
          %p193 = scmp.lt.s32.totalorder %s22, 0
          %s194 = scalar_select %p193, %s22, 0
          %s195 = sadd.s32 %s194, %s192
          %s196 = smul.addr %s195, 4
          %s197 = scalar_lea.vmem %s0, %s196
        $region28: #{tpu_custom_call.1} parent=23 // pred_fallthru
          _
        // Predicated region
        $region29: #{tpu_custom_call.1} parent=23 // pred_check
          %p198 = pneg %p76
        $region30: #{tpu_custom_call.1} parent=23 // pred_check_branch
          %200 = sbr.rel (%p198) target = $region32
        $region31: #{tpu_custom_call.1} parent=23 // pred_region
          %p201 = scmp.lt.s32.totalorder %s21, 1
          %s202 = scalar_select %p201, %s21, 1
          %p203 = scmp.lt.s32.totalorder %s22, 0
          %s204 = scalar_select %p203, %s22, 0
          %s205 = sadd.s32 %s204, %s202
          %s206 = smul.addr %s205, 4
          %s207 = scalar_lea.vmem %s1, %s206
        $region32: #{tpu_custom_call.1} parent=23 // pred_fallthru
          _
      $region24: #{tpu_custom_call.1} parent=5 // pred_fallthru
        _
      %p208 = scmp.le.s32.totalorder 1, %s14
      %p209 = scmp.lt.s32.totalorder %s14, 3
      %p210 = pnand %p208, %p209
      %p211 = pneg %p210
      // Predicated region
      $region33: #{tpu_custom_call.1} parent=5 // pred_check
        _
      $region34: #{tpu_custom_call.1} parent=5 // pred_check_branch
        %213 = sbr.rel (%p210) target = $region36
      $region35: #{tpu_custom_call.1} parent=5 // pred_region
        %s214 = ssub.s32 %s14, 1
        // Predicated region
        $region37: #{tpu_custom_call.1} parent=35 // pred_check
          %p215 = pneg %p103
        $region38: #{tpu_custom_call.1} parent=35 // pred_check_branch
          %217 = sbr.rel (%p215) target = $region40
        $region39: #{tpu_custom_call.1} parent=35 // pred_region
          %219 = dma.done [#allocation3], 256
        $region40: #{tpu_custom_call.1} parent=35 // pred_fallthru
          _
        %p220 = scmp.lt.s32.totalorder %s23, 1
        %s221 = scalar_select %p220, %s23, 1
        %p222 = scmp.lt.s32.totalorder %s24, 0
        %s223 = scalar_select %p222, %s24, 0
        %s224 = sadd.s32 %s223, %s221
        %s225 = smul.addr %s224, 4
        %s226 = scalar_lea.vmem %s0, %s225
        %p227 = pneg %p54
        %p228 = pneg %p51
        %p229 = scmp.lt.s32.totalorder %s23, 1
        %s230 = scalar_select %p229, %s23, 1
        %p231 = scmp.lt.s32.totalorder %s24, 0
        %s232 = scalar_select %p231, %s24, 0
        %s233 = sadd.s32 %s232, %s230
        %s234 = smul.addr %s233, 4
        %s235 = scalar_lea.vmem %s1, %s234
        %p236 = pneg %p82
        %p237 = pneg %p79
        %p238 = pneg %p103
        %p239 = pneg %p100
        %p240 = pneg %p124
        %p241 = pneg %p121
        %p242 = pneg %p152
        %p243 = pneg %p149
        %s244 = sand.u32 %s139, 1
        %s245 = scalar_lea.sflag [#allocation4], %s244
        %s246 = sand.u32 %s139, 1
        %s247 = smul.addr %s246, 8
        %s248 = scalar_lea.vmem [#allocation5], %s247
        %p249 = scmp.lt.s32.totalorder %s23, 1
        %s250 = scalar_select %p249, %s23, 1
        %p251 = scmp.lt.s32.totalorder %s24, 0
        %s252 = scalar_select %p251, %s24, 0
        %s253 = sadd.s32 %s252, %s250
        %s254 = smul.addr %s253, 4
        %s255 = scalar_lea.vmem %s0, %s254
        %p256 = scmp.lt.s32.totalorder %s23, 1
        %s257 = scalar_select %p256, %s23, 1
        %p258 = scmp.lt.s32.totalorder %s24, 0
        %s259 = scalar_select %p258, %s24, 0
        %s260 = sadd.s32 %s259, %s257
        %s261 = smul.addr %s260, 4
        %s262 = scalar_lea.vmem %s1, %s261
        %v263 = vld [vmem:[%s255] sm:$0xf]
        %v264 = vld [vmem:[%s262] sm:$0xf]
        %v265 = vlaneseq
        %v266 = vand.u32 %v265, 127
        %s267 = smul.u32 %s24, 16
        %v268 = vstv %s267
        %v269 = vadd.s32 %v266, %v268
        %vm270 = vcmp.eq.s32.totalorder %v266, 0
        %vm271 = vcmask 1047680
        %272 = vrot.lane.b32.xlu0 %v263, 16
        %v273 = vpop.permute.xlu0 %272
        %v274 = vsel %vm271, %v273, %v263
        %275 = vrot.lane.b32.xlu0 %v274, 16
        %v276 = vpop.permute.xlu0 %275
        %v277 = vsel %vm271, %v276, %v263
        %v278 = vsel %vm270, 1, 0
        %vm279 = vcmp.eq.s32.totalorder %v278, 1
        %281 = vset.pattern.permute.xlu0 0
        %282 = vperm.xlu0 %281, %v264
        %v283 = vpop.permute.xlu0 %282
        %286 = vrot.lane.b32.xlu0 %v277, 113
        %v287 = vpop.permute.xlu0 %286
        %v289 = vsel %vm279, %v283, %v287
        %vm290 = vcmp.eq.s32.totalorder %v266, 15
        %vm291 = vcmp.eq.s32.totalorder %v269, 15
        %vm292 = vmor %vm290, %vm291
        %v293 = vsel %vm292, 1, 0
        %vm294 = vcmp.eq.s32.totalorder %v293, 1
        %295 = vset.pattern.permute.xlu0 1
        %296 = vperm.xlu0 %295, %v264
        %v297 = vpop.permute.xlu0 %296
        %299 = vrot.lane.b32.xlu0 %v277, 127
        %v300 = vpop.permute.xlu0 %299
        %v302 = vsel %vm294, %v297, %v300
        %v303 = vld [vmem:[%s3] sm:$0xf]
        %s304 = scalar_lea.vmem [#allocation2], 4
        %v305 = vld [vmem:[%s304] sm:$0xf]
        %s306 = scalar_lea.vmem [#allocation2], 12
        %v307 = vld [vmem:[%s306] sm:$0xf]
        %vm308 = vcmask 31744
        %v310 = vsel %vm308, %v307, 0
        %vm312 = vcmask 1043456
        %v314 = vsel %vm312, %v289, 0
        %316 = vmatpush.msra.mxu0 0.0
        %317 = vmatpush.msra.mxu0 0.0
        %318 = vmatpush.msra.mxu0 0.0
        %319 = vmatpush.msra.mxu0 0.0
        %320 = vmatpush.msra.mxu0 0.0
        %321 = vmatpush.msra.mxu0 0.0
        %322 = vmatpush.msra.mxu0 0.0
        %323 = vmatpush.msra.mxu0 0.0
        %324 = vmatpush.msra.mxu0 0.0
        %325 = vmatpush.msra.mxu0 0.0
        %326 = vmatpush.msra.mxu0 0.0
        %327 = vmatpush.msra.mxu0 0.0
        %328 = vmatpush.msra.mxu0 0.0
        %329 = vmatpush.msra.mxu0 0.0
        %330 = vmatpush.msra.mxu0 0.0
        %331 = vmatpush.msra.mxu0 %v314
        %332 = vmatmul.f32.gmra.mxu0 %v310
        %v333 = vpop.f32.mrf.mxu0
        %v334 = vadd.f32 0.0, %v333
        %335 = vdwg.mxu0
        %v337 = vsel %vm308, %v305, 0
        %v340 = vsel %vm312, %v263, 0
        %342 = vmatpush.msra.mxu0 0.0
        %343 = vmatpush.msra.mxu0 0.0
        %344 = vmatpush.msra.mxu0 0.0
        %345 = vmatpush.msra.mxu0 0.0
        %346 = vmatpush.msra.mxu0 0.0
        %347 = vmatpush.msra.mxu0 0.0
        %348 = vmatpush.msra.mxu0 0.0
        %349 = vmatpush.msra.mxu0 0.0
        %350 = vmatpush.msra.mxu0 0.0
        %351 = vmatpush.msra.mxu0 0.0
        %352 = vmatpush.msra.mxu0 0.0
        %353 = vmatpush.msra.mxu0 0.0
        %354 = vmatpush.msra.mxu0 0.0
        %355 = vmatpush.msra.mxu0 0.0
        %356 = vmatpush.msra.mxu0 0.0
        %357 = vmatpush.msra.mxu0 %v340
        %358 = vmatmul.f32.gmra.mxu0 %v337
        %v359 = vpop.f32.mrf.mxu0
        %v360 = vadd.f32 %v334, %v359
        %361 = vdwg.mxu0
        %363 = vset.pattern.permute.xlu0 0
        %364 = vperm.xlu0 %363, %v303
        %v365 = vpop.permute.xlu0 %364
        %v367 = vadd.f32 %v360, %v365
        %s368 = scalar_lea.vmem [#allocation2], 8
        %v369 = vld [vmem:[%s368] sm:$0xf]
        %v370 = vld [vmem:[#allocation2] sm:$0xf]
        %v372 = vsel %vm308, %v370, 0
        %v375 = vsel %vm312, %v302, 0
        %377 = vmatpush.msra.mxu0 0.0
        %378 = vmatpush.msra.mxu0 0.0
        %379 = vmatpush.msra.mxu0 0.0
        %380 = vmatpush.msra.mxu0 0.0
        %381 = vmatpush.msra.mxu0 0.0
        %382 = vmatpush.msra.mxu0 0.0
        %383 = vmatpush.msra.mxu0 0.0
        %384 = vmatpush.msra.mxu0 0.0
        %385 = vmatpush.msra.mxu0 0.0
        %386 = vmatpush.msra.mxu0 0.0
        %387 = vmatpush.msra.mxu0 0.0
        %388 = vmatpush.msra.mxu0 0.0
        %389 = vmatpush.msra.mxu0 0.0
        %390 = vmatpush.msra.mxu0 0.0
        %391 = vmatpush.msra.mxu0 0.0
        %392 = vmatpush.msra.mxu0 %v375
        %393 = vmatmul.f32.gmra.mxu0 %v372
        %v394 = vpop.f32.mrf.mxu0
        %v395 = vadd.f32 0.0, %v394
        %396 = vdwg.mxu0
        %v398 = vsel %vm308, %v369, 0
        %400 = vmatpush.msra.mxu0 0.0
        %401 = vmatpush.msra.mxu0 0.0
        %402 = vmatpush.msra.mxu0 0.0
        %403 = vmatpush.msra.mxu0 0.0
        %404 = vmatpush.msra.mxu0 0.0
        %405 = vmatpush.msra.mxu0 0.0
        %406 = vmatpush.msra.mxu0 0.0
        %407 = vmatpush.msra.mxu0 0.0
        %408 = vmatpush.msra.mxu0 0.0
        %409 = vmatpush.msra.mxu0 0.0
        %410 = vmatpush.msra.mxu0 0.0
        %411 = vmatpush.msra.mxu0 0.0
        %412 = vmatpush.msra.mxu0 0.0
        %413 = vmatpush.msra.mxu0 0.0
        %414 = vmatpush.msra.mxu0 0.0
        %415 = vmatpush.msra.mxu0 %v340
        %416 = vmatmul.f32.gmra.mxu0 %v398
        %v417 = vpop.f32.mrf.mxu0
        %v418 = vadd.f32 %v395, %v417
        %419 = vdwg.mxu0
        %v420 = vadd.f32 %v418, %v365
        %vm421 = vcmask 125952
        %422 = vst.msk [vmem:[%s248] sm:$0xf] %vm421, %v367
        %s423 = scalar_lea.vmem %s248, 4 [#allocation5]
        %424 = vst.msk [vmem:[%s423] sm:$0xf] %vm421, %v420
        %s425 = sand.u32 %s139, 1
        %s426 = scalar_lea.sflag [#allocation4], %s425
        %s427 = sand.u32 %s139, 1
        %s428 = smul.addr %s427, 8
        %s429 = scalar_lea.vmem [#allocation5], %s428
        // Predicated region
        $region41: #{tpu_custom_call.1} parent=35 // pred_check
          %p430 = pneg %p149
        $region42: #{tpu_custom_call.1} parent=35 // pred_check_branch
          %432 = sbr.rel (%p430) target = $region44
        $region43: #{tpu_custom_call.1} parent=35 // pred_region
          %434 = vsyncadd %s426, 0
          %s435 = smul.addr %s23, 2
          %s436 = sadd.s32 %s24, %s435
          %s437 = smul.addr %s436, 4
          %s438 = scalar_lea.hbm %s4, %s437
          %s439 = sshll.u32 %s429, 4
          %s440 = int_to_ptr.vmem [resolvable:$true] %s439
          %s441 = sshll.u32 %s438, 4
          %s442 = int_to_ptr.hbm [resolvable:$true] %s441
          %447 = dma.vmem_to_hbm [thread:$0]  %s440, 128, %s442, %s426, 64, 64, 4
        $region44: #{tpu_custom_call.1} parent=35 // pred_fallthru
          _
      $region36: #{tpu_custom_call.1} parent=5 // pred_fallthru
        _
      %p448 = scmp.le.s32.totalorder 2, %s14
      // Predicated region
      $region45: #{tpu_custom_call.1} parent=5 // pred_check
        %p449 = pneg %p448
      $region46: #{tpu_custom_call.1} parent=5 // pred_check_branch
        %451 = sbr.rel (%p449) target = $region48
      $region47: #{tpu_custom_call.1} parent=5 // pred_region
        %s452 = ssub.s32 %s14, 2
        // Predicated region
        $region49: #{tpu_custom_call.1} parent=47 // pred_check
          %p453 = pneg %p155
        $region50: #{tpu_custom_call.1} parent=47 // pred_check_branch
          %455 = sbr.rel (%p453) target = $region52
        $region51: #{tpu_custom_call.1} parent=47 // pred_region
          %s456 = sand.u32 %s140, 1
          %s457 = scalar_lea.sflag [#allocation4], %s456
          %s458 = sand.u32 %s140, 1
          %s459 = smul.addr %s458, 8
          %s460 = scalar_lea.vmem [#allocation5], %s459
          %462 = dma.done %s457, 128
        $region52: #{tpu_custom_call.1} parent=47 // pred_fallthru
          _
      $region48: #{tpu_custom_call.1} parent=5 // pred_fallthru
        _
    $region6: #{tpu_custom_call.1} parent=1 // loop_footer
      %s18 = sadd.s32 1, %s14
    $region7: #{tpu_custom_call.1} parent=1 // loop_footer_branch
      %13 = sbr.rel target = $region3
    $region8: #{tpu_custom_call.1} parent=1 // loop_exit
      _
    %463 = vsyncpa [#allocation3], 1
    %s464 = scalar_lea.sflag [#allocation3], 1
    %465 = vsyncpa %s464, 1
    %466 = vsyncpa [#allocation4], 1
    %s467 = scalar_lea.sflag [#allocation4], 1
    %468 = vsyncpa %s467, 1

</llo_original>
